<compile_context>
chip_gen: v7x
topology: tpu7x:2x2x1
jax: 0.10.0
libtpu: 0.0.40
codegen_flags: <defaults>
</compile_context>

<pallas_src>
import math

import jax
import jax.numpy as jnp
from jax.experimental import pallas as pl
from jax.experimental.pallas import tpu as pltpu


def _make_pe(d_model: int, max_len: int, dtype=jnp.float32) -> jnp.ndarray:
    """Build the sinusoidal PE table exactly as the module's __init__ does."""
    r = d_model % 2
    d_pad = d_model + r
    position = jnp.arange(0, max_len, dtype=jnp.float32)[:, None]          # (L, 1)
    # NOTE: the PyTorch module divides by the *padded* d_model (d_model + r),
    # so we do the same (this also covers odd d_model correctly w.r.t. the spec).
    div_term = jnp.exp(
        jnp.arange(0, d_pad, 2, dtype=jnp.float32) * (-math.log(10000.0) / d_pad)
    )                                                                        # (d_pad/2,)
    pe = jnp.zeros((max_len, d_pad), dtype=jnp.float32)
    pe = pe.at[:, 0::2].set(jnp.sin(position * div_term))
    pe = pe.at[:, 1::2].set(jnp.cos(position * div_term))
    # pe.unsqueeze(0).transpose(0,1)[:, :, :d_model] -> keep 2-D (max_len, d_model);
    # the batch broadcast is handled by the kernel / grid.
    return pe[:, :d_model].astype(dtype)


def _add_pe_kernel(x_ref, pe_ref, o_ref):
    # x_ref / o_ref: (tb, ts, D)  -- sublanes = ts (dense), lanes = D (dense).
    # pe_ref:        (ts, D).
    # Broadcasting pe over the *leading* batch-tile dim is free on the VPU
    # (the same pe vregs are reused per batch row; no sublane relayout/XLU).
    o_ref[...] = x_ref[...] + pe_ref[...][None, :, :]


def _choose_tiles(B, S, D, itemsize, target_block_bytes=4 * 1024 * 1024):
    """Pick (batch_tile, seq_tile) so one x block is ~target_block_bytes."""
    row_bytes = max(int(D) * int(itemsize), 1)
    # seq tile: multiple of 8 (sublane-dense), a (ts, D) slab <= ~target/2
    ts = (target_block_bytes // 2) // row_bytes
    ts = max(8, (ts // 8) * 8)
    if ts >= S:
        ts = S                      # full extent: no divisibility constraint
    # batch tile: grow until the (tb, ts, D) block reaches ~target
    tb = max(1, target_block_bytes // max(ts * row_bytes, 1))
    tb = min(tb, B)
    return int(tb), int(ts)


def positional_encoding_forward_batch_first(
    x_bsd: jnp.ndarray, pe: jnp.ndarray, *, target_block_bytes: int = 4 * 1024 * 1024
) -> jnp.ndarray:
    """x_bsd: (batch, seq, d_model); pe: (max_len, d_model). Returns x + pe[:seq]."""
    B, S, D = x_bsd.shape
    pe_slice = pe[:S, :].astype(x_bsd.dtype)          # pe[:x.size(0)], in x's dtype

    tb, ts = _choose_tiles(B, S, D, jnp.dtype(x_bsd.dtype).itemsize, target_block_bytes)
    # Batch innermost: the pe block index is constant across it, so its DMA is
    # not re-issued; seq is the outer axis. Ragged last tiles are masked by Pallas.
    grid = (pl.cdiv(S, ts), pl.cdiv(B, tb))

    return pl.pallas_call(
        _add_pe_kernel,
        out_shape=jax.ShapeDtypeStruct((B, S, D), x_bsd.dtype),
        grid=grid,
        in_specs=[
            pl.BlockSpec((tb, ts, D), lambda si, bi: (bi, si, 0)),
            pl.BlockSpec((ts, D), lambda si, bi: (si, 0)),
        ],
        out_specs=pl.BlockSpec((tb, ts, D), lambda si, bi: (bi, si, 0)),
        compiler_params=pltpu.CompilerParams(
            dimension_semantics=("parallel", "parallel"),   # v7x: shard over 2 TCs
            vmem_limit_bytes=32 * 1024 * 1024,              # ~20 MiB of buffers used
        ),
    )(x_bsd, pe_slice)


def positional_encoding_forward(x: jnp.ndarray, pe: jnp.ndarray) -> jnp.ndarray:
    """Drop-in for the PyTorch module: x is (seq, batch, d_model).

    Dropout has p=0.0 in the module, so the forward is exactly x + pe[:seq]
    broadcast over batch.  In a real model, keep activations batch-first and
    call positional_encoding_forward_batch_first directly to avoid the two
    boundary transposes below (they exist only for layout parity with the
    PyTorch (seq, batch, d_model) convention).
    """
    x_bsd = jnp.transpose(x, (1, 0, 2))                 # (B, S, D): lane/sublane dense
    out_bsd = positional_encoding_forward_batch_first(x_bsd, pe)
    return jnp.transpose(out_bsd, (1, 0, 2))            # back to (S, B, D)


if __name__ == "__main__":
    # Small deterministic example matching the module's forward convention:
    # x: (seq=8, batch=2, d_model=32)
    seq, batch, d_model, max_len = 8, 2, 32, 64

    key = jax.random.PRNGKey(0)
    x = jax.random.normal(key, (seq, batch, d_model), dtype=jnp.float32)
    pe = _make_pe(d_model, max_len)                     # __init__-equivalent buffer

    out = positional_encoding_forward(x, pe)
    out = jax.block_until_ready(out)

    ref = x + pe[:seq][:, None, :]                      # dropout p=0.0 -> identity
    assert out.shape == (seq, batch, d_model)
    assert jnp.allclose(out, ref, atol=1e-6, rtol=1e-6), "mismatch vs reference"

    # Also exercise a multi-step, ragged (seq, batch) grid on the batch-first
    # fast path by forcing tiny blocks (tests the tiling/masking machinery).
    B2, S2 = 5, 40
    x2 = jax.random.normal(jax.random.PRNGKey(1), (B2, S2, d_model), dtype=jnp.float32)
    pe2 = _make_pe(d_model, 128)
    out2 = positional_encoding_forward_batch_first(x2, pe2, target_block_bytes=4096)
    out2 = jax.block_until_ready(out2)
    ref2 = x2 + pe2[:S2][None, :, :]
    assert jnp.allclose(out2, ref2, atol=1e-6, rtol=1e-6), "mismatch vs reference (tiled)"

    print("KERNEL_OK")
</pallas_src>

<mosaic_0001>
module attributes {stable_mosaic.version = 11 : i64} {
  func.func @_add_pe_kernel(%arg0: i32, %arg1: i32, %arg2: memref<2x8x32xf32, #tpu.memory_space<vmem>>, %arg3: memref<8x32xf32, #tpu.memory_space<vmem>>, %arg4: memref<2x8x32xf32, #tpu.memory_space<vmem>>) attributes {dimension_semantics = [#tpu.dimension_semantics<parallel>, #tpu.dimension_semantics<parallel>], iteration_bounds = array<i64: 1, 1>, scalar_prefetch = 0 : i64, scratch_operands = 0 : i64, tpu.core_type = #tpu.core_type<tc>, window_params = [{transform_indices = @transform_0, window_bounds = array<i64: 2, 8, 32>}, {transform_indices = @transform_1, window_bounds = array<i64: 8, 32>}, {transform_indices = @transform_2, window_bounds = array<i64: 2, 8, 32>}]} {
    %c0 = arith.constant 0 : index
    %c0_0 = arith.constant 0 : index
    %c0_1 = arith.constant 0 : index
    %0 = vector.load %arg2[%c0, %c0_0, %c0_1] : memref<2x8x32xf32, #tpu.memory_space<vmem>>, vector<2x8x32xf32>
    %c0_2 = arith.constant 0 : index
    %c0_3 = arith.constant 0 : index
    %1 = vector.load %arg3[%c0_2, %c0_3] : memref<8x32xf32, #tpu.memory_space<vmem>>, vector<8x32xf32>
    %2 = vector.shape_cast %1 : vector<8x32xf32> to vector<1x8x32xf32>
    %3 = vector.broadcast %2 : vector<1x8x32xf32> to vector<2x8x32xf32>
    %4 = arith.addf %0, %3 : vector<2x8x32xf32>
    %c0_4 = arith.constant 0 : index
    %c0_5 = arith.constant 0 : index
    %c0_6 = arith.constant 0 : index
    %5 = vector.load %arg4[%c0_4, %c0_5, %c0_6] : memref<2x8x32xf32, #tpu.memory_space<vmem>>, vector<2x8x32xf32>
    tpu.vector_store %arg4[%c0_4, %c0_5, %c0_6], %4 {strides = array<i32>} : memref<2x8x32xf32, #tpu.memory_space<vmem>>, vector<2x8x32xf32>,
    return
  }
  func.func @transform_0(%arg0: i32, %arg1: i32) -> (i32, i32, i32) {
    %c0_i32 = arith.constant 0 : i32
    %c0_i32_0 = arith.constant 0 : i32
    return %arg1, %arg0, %c0_i32 : i32, i32, i32
  }
  func.func @transform_1(%arg0: i32, %arg1: i32) -> (i32, i32) {
    %c0_i32 = arith.constant 0 : i32
    %c0_i32_0 = arith.constant 0 : i32
    return %arg0, %c0_i32 : i32, i32
  }
  func.func @transform_2(%arg0: i32, %arg1: i32) -> (i32, i32, i32) {
    %c0_i32 = arith.constant 0 : i32
    %c0_i32_0 = arith.constant 0 : i32
    return %arg1, %arg0, %c0_i32 : i32, i32, i32
  }
}

</mosaic_0001>

<llo_original>
// kernel: tpu_custom_call.1
$region0: #{tpu_custom_call.1}
  #allocation0 [shape = 'u32[]', space=smem, size = 0x4, offset = 0x4, fixed_abs, tag = 'smem constant byte address 0x4 - core index']
  #allocation1 [shape = 'u32[144,128]{1,0:T(1,128)}', space=vmem, size = 0x12000, scoped, tag = 'internal scratch']
  %s0 = inlined_call_operand.hbm [shape: f32[2,8,32], index: 0, kind: input, shape index: {}]
  %s1 = inlined_call_operand.hbm [shape: f32[8,32], index: 1, kind: input, shape index: {}]
  %s2 = inlined_call_operand.hbm [shape: f32[2,8,32], index: 2, kind: output, shape index: {}]
  %s3 = sld [smem:[#allocation0]]
  $region26: #{tpu_custom_call.1} parent=0
    _
  %s5 = ssub.s32 1, %s3
  %s6 = scalar_select 0, %s5, %s3
  $region1: #{tpu_custom_call.1} parent=0
    #allocation2 [shape = 'u8[8192]{0}', space=vmem, size = 0x2000, scoped, tag = 'input window, operand 0, single buffered']
    #allocation3 [shape = 's32[1]{0}', space=sflag, size = 0x4, scoped, tag = 'scoped memory for tpu_custom_call.1']
    #allocation4 [shape = 's32[1]{0}', space=sflag, size = 0x4, scoped, tag = 'scoped memory for tpu_custom_call.1']
    #allocation5 [shape = 'u8[4096]{0}', space=vmem, size = 0x1000, scoped, tag = 'input window, operand 1, single buffered']
    #allocation6 [shape = 's32[1]{0}', space=sflag, size = 0x4, scoped, tag = 'scoped memory for tpu_custom_call.1']
    #allocation7 [shape = 'u8[8192]{0}', space=vmem, size = 0x2000, scoped, tag = 'output window, operand 0, single buffered']
    %7 = vsyncpa [#allocation3], 0
    %8 = vsyncpa [#allocation6], 0
    %9 = vsyncpa [#allocation4], 0
    // Predicated region
    $region2: #{tpu_custom_call.1} parent=1 // pred_check
      _
    $region3: #{tpu_custom_call.1} parent=1 // pred_check_branch
      %11 = sbr.rel (0) target = $region5
    $region4: #{tpu_custom_call.1} parent=1 // pred_region
      %s13 = ssub.s32 256, 256
      %14 = vsyncadd [#allocation3], %s13
      %s15 = sshll.u32 [#allocation2], 4
      %s16 = int_to_ptr.vmem [resolvable:$true] %s15
      %21 = dma.hbm_to_vmem [thread:$0]  %s0, 256, %s16, [#allocation3], 128, 128, 8
    $region5: #{tpu_custom_call.1} parent=1 // pred_fallthru
      _
    // Predicated region
    $region6: #{tpu_custom_call.1} parent=1 // pred_check
      _
    $region7: #{tpu_custom_call.1} parent=1 // pred_check_branch
      %23 = sbr.rel (0) target = $region9
    $region8: #{tpu_custom_call.1} parent=1 // pred_region
      %s25 = ssub.s32 128, 128
      %26 = vsyncadd [#allocation6], %s25
      %s28 = sshll.u32 [#allocation5], 4
      %s29 = int_to_ptr.vmem [resolvable:$true] %s28
      %31 = dma.hbm_to_vmem [thread:$0]  %s1, 128, %s29, [#allocation6]
    $region9: #{tpu_custom_call.1} parent=1 // pred_fallthru
      _
    // Predicated region
    $region10: #{tpu_custom_call.1} parent=1 // pred_check
      _
    $region11: #{tpu_custom_call.1} parent=1 // pred_check_branch
      %33 = sbr.rel (0) target = $region13
    $region12: #{tpu_custom_call.1} parent=1 // pred_region
      %34 = dma.done [#allocation3], 256
    $region13: #{tpu_custom_call.1} parent=1 // pred_fallthru
      _
    // Predicated region
    $region14: #{tpu_custom_call.1} parent=1 // pred_check
      _
    $region15: #{tpu_custom_call.1} parent=1 // pred_check_branch
      %36 = sbr.rel (0) target = $region17
    $region16: #{tpu_custom_call.1} parent=1 // pred_region
      %37 = dma.done [#allocation6], 128
    $region17: #{tpu_custom_call.1} parent=1 // pred_fallthru
      _
    %v38 = vld [vmem:[#allocation2] sm:$0xff]
    %v39 = vld [vmem:[#allocation2 + $0x8] sm:$0xff]
    %v40 = vld [vmem:[#allocation5] sm:$0xff]
    %v41 = vadd.f32 %v38, %v40
    %v42 = vadd.f32 %v39, %v40
    %vm43 = vcmask 261120
    %44 = vst.msk [vmem:[#allocation7] sm:$0xff] %vm43, %v41
    %45 = vst.msk [vmem:[#allocation7 + $0x8] sm:$0xff] %vm43, %v42
    // Predicated region
    $region18: #{tpu_custom_call.1} parent=1 // pred_check
      _
    $region19: #{tpu_custom_call.1} parent=1 // pred_check_branch
      %47 = sbr.rel (0) target = $region21
    $region20: #{tpu_custom_call.1} parent=1 // pred_region
      %s49 = ssub.s32 256, 256
      %50 = vsyncadd [#allocation4], %s49
      %s51 = sshll.u32 [#allocation7], 4
      %s52 = int_to_ptr.vmem [resolvable:$true] %s51
      %57 = dma.vmem_to_hbm [thread:$0]  %s52, 256, %s2, [#allocation4], 128, 128, 8
    $region21: #{tpu_custom_call.1} parent=1 // pred_fallthru
      _
    // Predicated region
    $region22: #{tpu_custom_call.1} parent=1 // pred_check
      _
    $region23: #{tpu_custom_call.1} parent=1 // pred_check_branch
      %59 = sbr.rel (0) target = $region25
    $region24: #{tpu_custom_call.1} parent=1 // pred_region
      %60 = dma.done [#allocation4], 256
    $region25: #{tpu_custom_call.1} parent=1 // pred_fallthru
      _
    %61 = vsyncpa [#allocation3], 1
    %62 = vsyncpa [#allocation6], 1
    %63 = vsyncpa [#allocation4], 1

</llo_original>
